<compile_context>
chip_gen: v7x
topology: tpu7x:2x2x1
jax: 0.10.0
libtpu: 0.0.40
codegen_flags: <defaults>
</compile_context>

<pallas_src>
import functools

import jax
import jax.numpy as jnp
from jax.experimental import pallas as pl
from jax.experimental.pallas import tpu as pltpu

EPS = 1e-5


def _linear_bn_kernel(x_ref, w_ref, g_ref, beta_ref, out_ref, *, relu, batch):
    # x_ref:    [B, Din]  bf16  (full batch + contraction dim, resident)
    # w_ref:    [Din, tn] bf16  (one output-feature slab, pipelined)
    # g_ref:    [1, tn]   f32   (BN gamma slab)
    # beta_ref: [1, tn]   f32   (BN beta slab)
    # out_ref:  [B, tn]
    h = jnp.dot(x_ref[...], w_ref[...], preferred_element_type=jnp.float32)

    # Training-mode BatchNorm1d, single-pass stats:
    #   mean = E[h], var = E[h^2] - E[h]^2  (biased variance, as PyTorch uses
    #   for normalization).  Both reductions read h once.
    inv_b = 1.0 / float(batch)
    mean = jnp.sum(h, axis=0, keepdims=True) * inv_b
    mean_sq = jnp.sum(h * h, axis=0, keepdims=True) * inv_b
    var = jnp.maximum(mean_sq - mean * mean, 0.0)

    # Fold normalize + affine into one scale/shift (2 full-tile VPU ops).
    scale = g_ref[...] * jax.lax.rsqrt(var + EPS)
    shift = beta_ref[...] - mean * scale
    h = h * scale + shift
    if relu:
        h = jnp.maximum(h, 0.0)
    out_ref[...] = h.astype(out_ref.dtype)


def _pick_block_n(dout, prefer=512):
    """Largest multiple of 128 that divides dout and is <= prefer."""
    if dout % 128 != 0:
        return dout
    tn = 128
    for cand in range(128, min(dout, prefer) + 128, 128):
        if cand <= dout and dout % cand == 0:
            tn = cand
    return tn


def _linear_bn(x, w, g, beta, *, relu, out_dtype, block_n=None):
    B, din = x.shape
    dout = w.shape[1]
    tn = _pick_block_n(dout) if block_n is None else block_n
    assert dout % tn == 0, (dout, tn)
    grid = (dout // tn,)

    return pl.pallas_call(
        functools.partial(_linear_bn_kernel, relu=relu, batch=B),
        out_shape=jax.ShapeDtypeStruct((B, dout), out_dtype),
        grid=grid,
        in_specs=[
            # Full-batch activations: constant block index -> loaded once,
            # stays resident across all N tiles.
            pl.BlockSpec((B, din), lambda j: (0, 0)),
            # Per-tile weight slab (double-buffered by the pipeline).
            pl.BlockSpec((din, tn), lambda j: (0, j)),
            pl.BlockSpec((1, tn), lambda j: (0, j)),
            pl.BlockSpec((1, tn), lambda j: (0, j)),
        ],
        out_specs=pl.BlockSpec((B, tn), lambda j: (0, j)),
        compiler_params=pltpu.CompilerParams(
            dimension_semantics=("parallel",)),
    )(x, w, g, beta)


def projector_forward(x, params, *, block_n=None):
    """x: [B, in_dim].  params: dict from init_params (bf16 weights)."""
    h = x.astype(jnp.bfloat16)
    h = _linear_bn(h, params["w1"], params["g1"], params["be1"],
                   relu=True, out_dtype=jnp.bfloat16, block_n=block_n)
    h = _linear_bn(h, params["w2"], params["g2"], params["be2"],
                   relu=True, out_dtype=jnp.bfloat16, block_n=block_n)
    h = _linear_bn(h, params["w3"], params["g3"], params["be3"],
                   relu=False, out_dtype=jnp.float32, block_n=block_n)
    return h


def init_params(key, in_dim, hidden_dim, out_dim):
    """Deterministic synthetic parameters (same shapes as the PyTorch module).

    Weights are stored bf16 (MXU input precision).  Linear biases are kept
    (f32) only for the reference: under training-mode BN they cancel exactly,
    so the kernel never consumes them.
    """
    ks = jax.random.split(key, 6)

    def linear(kw, kb, din, dout):
        bound = 1.0 / jnp.sqrt(din)
        w = jax.random.uniform(kw, (din, dout), jnp.float32, -bound, bound)
        b = jax.random.uniform(kb, (1, dout), jnp.float32, -bound, bound)
        return w.astype(jnp.bfloat16), b

    w1, b1 = linear(ks[0], ks[1], in_dim, hidden_dim)
    w2, b2 = linear(ks[2], ks[3], hidden_dim, hidden_dim)
    w3, b3 = linear(ks[4], ks[5], hidden_dim, out_dim)

    ones = lambda d: jnp.ones((1, d), jnp.float32)
    zeros = lambda d: jnp.zeros((1, d), jnp.float32)
    return dict(
        w1=w1, b1=b1, g1=ones(hidden_dim), be1=zeros(hidden_dim),
        w2=w2, b2=b2, g2=ones(hidden_dim), be2=zeros(hidden_dim),
        w3=w3, b3=b3, g3=ones(out_dim),    be3=zeros(out_dim),
    )


def projector_reference(x, p):
    """Pure-JAX reference mirroring the PyTorch forward (training-mode BN,
    Linear bias INCLUDED) at the kernel's MXU input precision
    (bf16 matmul inputs, f32 accumulation, f32 BN math)."""
    def block(h, w, b, g, be, relu):
        h = jnp.dot(h.astype(jnp.bfloat16), w.astype(jnp.bfloat16),
                    preferred_element_type=jnp.float32) + b
        m = jnp.mean(h, axis=0, keepdims=True)
        v = jnp.mean((h - m) ** 2, axis=0, keepdims=True)
        h = (h - m) / jnp.sqrt(v + EPS) * g + be
        return jnp.maximum(h, 0.0) if relu else h

    h = block(x, p["w1"], p["b1"], p["g1"], p["be1"], True)
    h = block(h, p["w2"], p["b2"], p["g2"], p["be2"], True)
    h = block(h, p["w3"], p["b3"], p["g3"], p["be3"], False)
    return h


if __name__ == "__main__":
    # Small but TPU-shaped: dims aligned to the (8, 128) vreg tile and a full
    # MXU tile of batch rows (avoids the K<128 / M=8 under-utilization traps).
    # hidden == out, matching the PyTorch module's BatchNorm1d(hidden_dim) on
    # layer3 (standard SimSiam config).
    B, IN_DIM, HIDDEN, OUT_DIM = 128, 128, 256, 256

    key = jax.random.PRNGKey(0)
    kx, kp = jax.random.split(key)
    x = jax.random.normal(kx, (B, IN_DIM), jnp.float32)
    params = init_params(kp, IN_DIM, HIDDEN, OUT_DIM)

    # block_n=128 -> 2 grid steps per layer (exercises the parallel N tiling).
    out = projector_forward(x, params, block_n=128)
    out = jax.block_until_ready(out)

    ref = projector_reference(x, params)
    assert out.shape == (B, OUT_DIM), out.shape
    assert jnp.allclose(out, ref, atol=2e-3, rtol=2e-3), (
        "mismatch vs reference, max abs diff = "
        f"{float(jnp.max(jnp.abs(out - ref)))}")

    print("KERNEL_OK")
</pallas_src>

<mosaic_0001>
module attributes {stable_mosaic.version = 11 : i64} {
  func.func @_linear_bn_kernel(%arg0: i32, %arg1: memref<128x128xbf16, #tpu.memory_space<vmem>>, %arg2: memref<128x128xbf16, #tpu.memory_space<vmem>>, %arg3: memref<1x128xf32, #tpu.memory_space<vmem>>, %arg4: memref<1x128xf32, #tpu.memory_space<vmem>>, %arg5: memref<128x128xbf16, #tpu.memory_space<vmem>>) attributes {dimension_semantics = [#tpu.dimension_semantics<parallel>], iteration_bounds = array<i64: 2>, scalar_prefetch = 0 : i64, scratch_operands = 0 : i64, tpu.core_type = #tpu.core_type<tc>, window_params = [{pipeline_mode = #tpu.pipeline_mode<synchronous>, transform_indices = @transform_0, window_bounds = array<i64: 128, 128>}, {transform_indices = @transform_1, window_bounds = array<i64: 128, 128>}, {transform_indices = @transform_2, window_bounds = array<i64: 1, 128>}, {transform_indices = @transform_3, window_bounds = array<i64: 1, 128>}, {transform_indices = @transform_4, window_bounds = array<i64: 128, 128>}]} {
    %c0 = arith.constant 0 : index
    %c0_0 = arith.constant 0 : index
    %0 = vector.load %arg1[%c0, %c0_0] : memref<128x128xbf16, #tpu.memory_space<vmem>>, vector<128x128xbf16>
    %c0_1 = arith.constant 0 : index
    %c0_2 = arith.constant 0 : index
    %1 = vector.load %arg2[%c0_1, %c0_2] : memref<128x128xbf16, #tpu.memory_space<vmem>>, vector<128x128xbf16>
    %cst = arith.constant dense<0.000000e+00> : vector<128x128xf32>
    %2 = tpu.matmul %0, %1, %cst {dimension_numbers = #tpu.dot_dimension_numbers<[1], [0], [0], [1], [0, 0, 1, 1], [], []>} : vector<128x128xbf16>, vector<128x128xbf16>, vector<128x128xf32> -> vector<128x128xf32>
    %cst_3 = arith.constant dense<0.000000e+00> : vector<128xf32>
    %3 = vector.multi_reduction <add>, %2, %cst_3 [0] : vector<128x128xf32> to vector<128xf32>
    %4 = vector.shape_cast %3 : vector<128xf32> to vector<1x128xf32>
    %cst_4 = arith.constant 7.812500e-03 : f32
    %5 = vector.broadcast %cst_4 : f32 to vector<1x128xf32>
    %6 = arith.mulf %4, %5 : vector<1x128xf32>
    %7 = arith.mulf %2, %2 : vector<128x128xf32>
    %cst_5 = arith.constant dense<0.000000e+00> : vector<128xf32>
    %8 = vector.multi_reduction <add>, %7, %cst_5 [0] : vector<128x128xf32> to vector<128xf32>
    %9 = vector.shape_cast %8 : vector<128xf32> to vector<1x128xf32>
    %cst_6 = arith.constant 7.812500e-03 : f32
    %10 = vector.broadcast %cst_6 : f32 to vector<1x128xf32>
    %11 = arith.mulf %9, %10 : vector<1x128xf32>
    %12 = arith.mulf %6, %6 : vector<1x128xf32>
    %13 = arith.subf %11, %12 : vector<1x128xf32>
    %cst_7 = arith.constant 0.000000e+00 : f32
    %14 = vector.broadcast %cst_7 : f32 to vector<1x128xf32>
    %15 = arith.maximumf %13, %14 : vector<1x128xf32>
    %c0_8 = arith.constant 0 : index
    %c0_9 = arith.constant 0 : index
    %16 = vector.load %arg3[%c0_8, %c0_9] : memref<1x128xf32, #tpu.memory_space<vmem>>, vector<1x128xf32>
    %cst_10 = arith.constant 9.99999974E-6 : f32
    %17 = vector.broadcast %cst_10 : f32 to vector<1x128xf32>
    %18 = arith.addf %15, %17 : vector<1x128xf32>
    %19 = math.rsqrt %18 : vector<1x128xf32>
    %20 = arith.mulf %16, %19 : vector<1x128xf32>
    %c0_11 = arith.constant 0 : index
    %c0_12 = arith.constant 0 : index
    %21 = vector.load %arg4[%c0_11, %c0_12] : memref<1x128xf32, #tpu.memory_space<vmem>>, vector<1x128xf32>
    %22 = arith.mulf %6, %20 : vector<1x128xf32>
    %23 = arith.subf %21, %22 : vector<1x128xf32>
    %24 = vector.broadcast %20 : vector<1x128xf32> to vector<128x128xf32>
    %25 = arith.mulf %2, %24 : vector<128x128xf32>
    %26 = vector.broadcast %23 : vector<1x128xf32> to vector<128x128xf32>
    %27 = arith.addf %25, %26 : vector<128x128xf32>
    %cst_13 = arith.constant 0.000000e+00 : f32
    %28 = vector.broadcast %cst_13 : f32 to vector<128x128xf32>
    %29 = arith.maximumf %27, %28 : vector<128x128xf32>
    %30 = arith.truncf %29 : vector<128x128xf32> to vector<128x128xbf16>
    %c0_14 = arith.constant 0 : index
    %c0_15 = arith.constant 0 : index
    %31 = vector.load %arg5[%c0_14, %c0_15] : memref<128x128xbf16, #tpu.memory_space<vmem>>, vector<128x128xbf16>
    tpu.vector_store %arg5[%c0_14, %c0_15], %30 {strides = array<i32>} : memref<128x128xbf16, #tpu.memory_space<vmem>>, vector<128x128xbf16>,
    return
  }
  func.func @transform_0(%arg0: i32) -> (i32, i32) {
    %c0_i32 = arith.constant 0 : i32
    %c0_i32_0 = arith.constant 0 : i32
    %c0_i32_1 = arith.constant 0 : i32
    return %c0_i32, %c0_i32_0 : i32, i32
  }
  func.func @transform_1(%arg0: i32) -> (i32, i32) {
    %c0_i32 = arith.constant 0 : i32
    %c0_i32_0 = arith.constant 0 : i32
    return %c0_i32, %arg0 : i32, i32
  }
  func.func @transform_2(%arg0: i32) -> (i32, i32) {
    %c0_i32 = arith.constant 0 : i32
    %c0_i32_0 = arith.constant 0 : i32
    return %c0_i32, %arg0 : i32, i32
  }
  func.func @transform_3(%arg0: i32) -> (i32, i32) {
    %c0_i32 = arith.constant 0 : i32
    %c0_i32_0 = arith.constant 0 : i32
    return %c0_i32, %arg0 : i32, i32
  }
  func.func @transform_4(%arg0: i32) -> (i32, i32) {
    %c0_i32 = arith.constant 0 : i32
    %c0_i32_0 = arith.constant 0 : i32
    return %c0_i32, %arg0 : i32, i32
  }
}

</mosaic_0001>

<llo_original>
// kernel: tpu_custom_call.1
$region0: #{tpu_custom_call.1}
  #allocation0 [shape = 'u32[]', space=smem, size = 0x4, offset = 0x4, fixed_abs, tag = 'smem constant byte address 0x4 - core index']
  #allocation1 [shape = 'u32[144,128]{1,0:T(1,128)}', space=vmem, size = 0x12000, scoped, tag = 'internal scratch']
  %s0 = inlined_call_operand.hbm [shape: bf16[128,128], index: 0, kind: input, shape index: {}]
  %s1 = inlined_call_operand.hbm [shape: bf16[128,256], index: 1, kind: input, shape index: {}]
  %s2 = inlined_call_operand.vmem [shape: f32[1,256], index: 2, kind: input, shape index: {}]
  %s3 = inlined_call_operand.vmem [shape: f32[1,256], index: 3, kind: input, shape index: {}]
  %s4 = inlined_call_operand.hbm [shape: bf16[128,256], index: 4, kind: output, shape index: {}]
  %s5 = sld [smem:[#allocation0]]
  $region57: #{tpu_custom_call.1} parent=0
    _
  %s7 = ssub.s32 1, %s5
  %s8 = scalar_select 0, %s7, %s5
  $region1: #{tpu_custom_call.1} parent=0
    #allocation2 [shape = 'u8[32768]{0}', space=vmem, size = 0x8000, scoped, tag = 'input window, operand 0, single buffered']
    #allocation3 [shape = 's32[2]{0}', space=sflag, size = 0x8, scoped, tag = 'scoped memory for tpu_custom_call.1']
    #allocation4 [shape = 's32[2]{0}', space=sflag, size = 0x8, scoped, tag = 'scoped memory for tpu_custom_call.1']
    #allocation5 [shape = 'u8[65536]{0}', space=vmem, size = 0x10000, scoped, tag = 'input window, operand 1']
    #allocation6 [shape = 's32[2]{0}', space=sflag, size = 0x8, scoped, tag = 'scoped memory for tpu_custom_call.1']
    #allocation7 [shape = 'u8[65536]{0}', space=vmem, size = 0x10000, scoped, tag = 'output window, operand 0']
    %9 = vsyncpa [#allocation3], 0
    %10 = vsyncpa [#allocation6], 0
    %s11 = scalar_lea.sflag [#allocation6], 1
    %12 = vsyncpa %s11, 0
    %13 = vsyncpa [#allocation4], 0
    %s14 = scalar_lea.sflag [#allocation4], 1
    %15 = vsyncpa %s14, 0
    loop: start=0, step=1, limit=4
    $region2: #{tpu_custom_call.1} parent=1 // loop_pre_header
      _
    $region3: #{tpu_custom_call.1} parent=1 // loop_header
      %s17 = sphi 0, %s21
      %p18 = scmp.ge.s32.totalorder %s17, 4
      %s25 = sphi 0, %s25
      %s27 = sphi 0, %s25
      %s28 = sphi 0, %s27
      %s42 = sphi 0, %s28
      %s48 = sphi 0, %s50
      %s51 = sphi 0, %s48
      %s52 = sphi 0, %s51
      %s68 = sphi 0, %s52
      %s74 = sphi 0, %s76
      %s77 = sphi 0, %s74
      %s78 = sphi 0, %s77
      %s94 = sphi 0, %s78
      %s100 = sphi 0, %s102
      %s103 = sphi 0, %s100
      %s104 = sphi 0, %s103
      %s120 = sphi 0, %s104
      %s126 = sphi 0, %s128
      %s129 = sphi 0, %s126
      %s130 = sphi 0, %s129
      %s146 = sphi 0, %s130
    $region4: #{tpu_custom_call.1} parent=1 // loop_header_branch
      %20 = sbr.rel (%p18) target = $region8
    $region5: #{tpu_custom_call.1} parent=1 // loop_body
      %s22 = ssub.s32 %s17, 1
      %s23 = ssub.s32 %s17, 2
      %s24 = sadd.s32 %s17, 1
      %s26 = sadd.s32 %s25, 1
      %p29 = scmp.eq.s32.totalorder %s17, 1
      %p30 = scmp.ne.s32.totalorder %s25, %s27
      %p31 = scmp.eq.s32.totalorder %s17, 0
      %p32 = por %p30, %p31
      %p33 = scmp.ne.s32.totalorder %s25, %s27
      %p34 = scmp.eq.s32.totalorder %s22, 1
      %p35 = por %p33, %p34
      %p36 = scmp.ne.s32.totalorder %s27, %s28
      %p37 = scmp.eq.s32.totalorder %s22, 0
      %p38 = por %p36, %p37
      %p39 = scmp.ne.s32.totalorder %s27, %s28
      %p40 = scmp.eq.s32.totalorder %s23, 1
      %p41 = por %p39, %p40
      %p43 = scmp.ne.s32.totalorder %s28, %s42
      %p44 = scmp.eq.s32.totalorder %s23, 0
      %p45 = por %p43, %p44
      %s46 = ssub.s32 %s17, %s24
      %p47 = scmp.eq.s32.totalorder %s46, 0
      %s49 = sadd.s32 %s48, 1
      %s50 = scalar_select %p47, %s48, %s49
      %p53 = pneg %p47
      %p54 = scmp.eq.s32.totalorder %s17, 1
      %p55 = por %p53, %p54
      %p56 = scmp.ne.s32.totalorder %s48, %s51
      %p57 = scmp.eq.s32.totalorder %s17, 0
      %p58 = por %p56, %p57
      %p59 = scmp.ne.s32.totalorder %s48, %s51
      %p60 = scmp.eq.s32.totalorder %s22, 1
      %p61 = por %p59, %p60
      %p62 = scmp.ne.s32.totalorder %s51, %s52
      %p63 = scmp.eq.s32.totalorder %s22, 0
      %p64 = por %p62, %p63
      %p65 = scmp.ne.s32.totalorder %s51, %s52
      %p66 = scmp.eq.s32.totalorder %s23, 1
      %p67 = por %p65, %p66
      %p69 = scmp.ne.s32.totalorder %s52, %s68
      %p70 = scmp.eq.s32.totalorder %s23, 0
      %p71 = por %p69, %p70
      %s72 = ssub.s32 %s17, %s24
      %p73 = scmp.eq.s32.totalorder %s72, 0
      %s75 = sadd.s32 %s74, 1
      %s76 = scalar_select %p73, %s74, %s75
      %p79 = pneg %p73
      %p80 = scmp.eq.s32.totalorder %s17, 1
      %p81 = por %p79, %p80
      %p82 = scmp.ne.s32.totalorder %s74, %s77
      %p83 = scmp.eq.s32.totalorder %s17, 0
      %p84 = por %p82, %p83
      %p85 = scmp.ne.s32.totalorder %s74, %s77
      %p86 = scmp.eq.s32.totalorder %s22, 1
      %p87 = por %p85, %p86
      %p88 = scmp.ne.s32.totalorder %s77, %s78
      %p89 = scmp.eq.s32.totalorder %s22, 0
      %p90 = por %p88, %p89
      %p91 = scmp.ne.s32.totalorder %s77, %s78
      %p92 = scmp.eq.s32.totalorder %s23, 1
      %p93 = por %p91, %p92
      %p95 = scmp.ne.s32.totalorder %s78, %s94
      %p96 = scmp.eq.s32.totalorder %s23, 0
      %p97 = por %p95, %p96
      %s98 = ssub.s32 %s17, %s24
      %p99 = scmp.eq.s32.totalorder %s98, 0
      %s101 = sadd.s32 %s100, 1
      %s102 = scalar_select %p99, %s100, %s101
      %p105 = pneg %p99
      %p106 = scmp.eq.s32.totalorder %s17, 1
      %p107 = por %p105, %p106
      %p108 = scmp.ne.s32.totalorder %s100, %s103
      %p109 = scmp.eq.s32.totalorder %s17, 0
      %p110 = por %p108, %p109
      %p111 = scmp.ne.s32.totalorder %s100, %s103
      %p112 = scmp.eq.s32.totalorder %s22, 1
      %p113 = por %p111, %p112
      %p114 = scmp.ne.s32.totalorder %s103, %s104
      %p115 = scmp.eq.s32.totalorder %s22, 0
      %p116 = por %p114, %p115
      %p117 = scmp.ne.s32.totalorder %s103, %s104
      %p118 = scmp.eq.s32.totalorder %s23, 1
      %p119 = por %p117, %p118
      %p121 = scmp.ne.s32.totalorder %s104, %s120
      %p122 = scmp.eq.s32.totalorder %s23, 0
      %p123 = por %p121, %p122
      %s124 = ssub.s32 %s17, %s24
      %p125 = scmp.eq.s32.totalorder %s124, 0
      %s127 = sadd.s32 %s126, 1
      %s128 = scalar_select %p125, %s126, %s127
      %p131 = pneg %p125
      %p132 = scmp.eq.s32.totalorder %s17, 1
      %p133 = por %p131, %p132
      %p134 = scmp.ne.s32.totalorder %s126, %s129
      %p135 = scmp.eq.s32.totalorder %s17, 0
      %p136 = por %p134, %p135
      %p137 = scmp.ne.s32.totalorder %s126, %s129
      %p138 = scmp.eq.s32.totalorder %s22, 1
      %p139 = por %p137, %p138
      %p140 = scmp.ne.s32.totalorder %s129, %s130
      %p141 = scmp.eq.s32.totalorder %s22, 0
      %p142 = por %p140, %p141
      %p143 = scmp.ne.s32.totalorder %s129, %s130
      %p144 = scmp.eq.s32.totalorder %s23, 1
      %p145 = por %p143, %p144
      %p147 = scmp.ne.s32.totalorder %s130, %s146
      %p148 = scmp.eq.s32.totalorder %s23, 0
      %p149 = por %p147, %p148
      %p150 = scmp.le.s32.totalorder 1, %s17
      %p151 = scmp.lt.s32.totalorder %s17, 3
      %p152 = pnand %p150, %p151
      %p153 = pneg %p152
      // Predicated region
      $region9: #{tpu_custom_call.1} parent=5 // pred_check
        _
      $region10: #{tpu_custom_call.1} parent=5 // pred_check_branch
        %155 = sbr.rel (%p152) target = $region12
      $region11: #{tpu_custom_call.1} parent=5 // pred_region
        %s156 = ssub.s32 %s17, 1
        // Predicated region
        $region13: #{tpu_custom_call.1} parent=11 // pred_check
          %p157 = pneg %p38
        $region14: #{tpu_custom_call.1} parent=11 // pred_check_branch
          %159 = sbr.rel (%p157) target = $region16
        $region15: #{tpu_custom_call.1} parent=11 // pred_region
          %s161 = ssub.s32 1024, 1024
          %162 = vsyncadd [#allocation3], %s161
          %s163 = sshll.u32 [#allocation2], 4
          %s164 = int_to_ptr.vmem [resolvable:$true] %s163
          %169 = dma.hbm_to_vmem [thread:$0]  %s0, 1024, %s164, [#allocation3], 64, 64, 4
        $region16: #{tpu_custom_call.1} parent=11 // pred_fallthru
          _
      $region12: #{tpu_custom_call.1} parent=5 // pred_fallthru
        _
      %p170 = scmp.lt.s32.totalorder %s17, 2
      // Predicated region
      $region17: #{tpu_custom_call.1} parent=5 // pred_check
        %p171 = pneg %p170
      $region18: #{tpu_custom_call.1} parent=5 // pred_check_branch
        %173 = sbr.rel (%p171) target = $region20
      $region19: #{tpu_custom_call.1} parent=5 // pred_region
        // Predicated region
        $region21: #{tpu_custom_call.1} parent=19 // pred_check
          %p174 = pneg %p58
        $region22: #{tpu_custom_call.1} parent=19 // pred_check_branch
          %176 = sbr.rel (%p174) target = $region24
        $region23: #{tpu_custom_call.1} parent=19 // pred_region
          %s177 = sand.u32 %s48, 1
          %s178 = scalar_lea.sflag [#allocation6], %s177
          %s179 = sand.u32 %s48, 1
          %s180 = smul.addr %s179, 64
          %s181 = scalar_lea.vmem [#allocation5], %s180
          %s183 = ssub.s32 1024, 1024
          %184 = vsyncadd %s178, %s183
          %s185 = smul.addr %s17, 64
          %s186 = scalar_lea.hbm %s1, %s185
          %s187 = sshll.u32 %s181, 4
          %s188 = int_to_ptr.vmem [resolvable:$true] %s187
          %193 = dma.hbm_to_vmem [thread:$0]  %s186, 1024, %s188, %s178, 128, 64, 4
        $region24: #{tpu_custom_call.1} parent=19 // pred_fallthru
          _
        // Predicated region
        $region25: #{tpu_custom_call.1} parent=19 // pred_check
          %p194 = pneg %p84
        $region26: #{tpu_custom_call.1} parent=19 // pred_check_branch
          %196 = sbr.rel (%p194) target = $region28
        $region27: #{tpu_custom_call.1} parent=19 // pred_region
          %p197 = scmp.lt.s32.totalorder %s17, 1
          %s198 = scalar_select %p197, %s17, 1
          %s199 = scalar_lea.vmem %s2, %s198
        $region28: #{tpu_custom_call.1} parent=19 // pred_fallthru
          _
        // Predicated region
        $region29: #{tpu_custom_call.1} parent=19 // pred_check
          %p200 = pneg %p110
        $region30: #{tpu_custom_call.1} parent=19 // pred_check_branch
          %202 = sbr.rel (%p200) target = $region32
        $region31: #{tpu_custom_call.1} parent=19 // pred_region
          %p203 = scmp.lt.s32.totalorder %s17, 1
          %s204 = scalar_select %p203, %s17, 1
          %s205 = scalar_lea.vmem %s3, %s204
        $region32: #{tpu_custom_call.1} parent=19 // pred_fallthru
          _
      $region20: #{tpu_custom_call.1} parent=5 // pred_fallthru
        _
      %p206 = scmp.le.s32.totalorder 1, %s17
      %p207 = scmp.lt.s32.totalorder %s17, 3
      %p208 = pnand %p206, %p207
      %p209 = pneg %p208
      // Predicated region
      $region33: #{tpu_custom_call.1} parent=5 // pred_check
        _
      $region34: #{tpu_custom_call.1} parent=5 // pred_check_branch
        %211 = sbr.rel (%p208) target = $region36
      $region35: #{tpu_custom_call.1} parent=5 // pred_region
        %s212 = ssub.s32 %s17, 1
        // Predicated region
        $region37: #{tpu_custom_call.1} parent=35 // pred_check
          %p213 = pneg %p38
        $region38: #{tpu_custom_call.1} parent=35 // pred_check_branch
          %215 = sbr.rel (%p213) target = $region40
        $region39: #{tpu_custom_call.1} parent=35 // pred_region
          %216 = dma.done [#allocation3], 1024
        $region40: #{tpu_custom_call.1} parent=35 // pred_fallthru
          _
        %s217 = sand.u32 %s51, 1
        %s218 = scalar_lea.sflag [#allocation6], %s217
        %s219 = sand.u32 %s51, 1
        %s220 = smul.addr %s219, 64
        %s221 = scalar_lea.vmem [#allocation5], %s220
        // Predicated region
        $region41: #{tpu_custom_call.1} parent=35 // pred_check
          %p222 = pneg %p64
        $region42: #{tpu_custom_call.1} parent=35 // pred_check_branch
          %224 = sbr.rel (%p222) target = $region44
        $region43: #{tpu_custom_call.1} parent=35 // pred_region
          %225 = dma.done %s218, 1024
        $region44: #{tpu_custom_call.1} parent=35 // pred_fallthru
          _
        %p226 = pneg %p38
        %p227 = pneg %p35
        %s228 = sand.u32 %s51, 1
        %s229 = scalar_lea.sflag [#allocation6], %s228
        %s230 = sand.u32 %s51, 1
        %s231 = smul.addr %s230, 64
        %s232 = scalar_lea.vmem [#allocation5], %s231
        %p233 = pneg %p64
        %p234 = pneg %p61
        %p235 = scmp.lt.s32.totalorder %s22, 1
        %s236 = scalar_select %p235, %s22, 1
        %s237 = scalar_lea.vmem %s2, %s236
        %p238 = pneg %p90
        %p239 = pneg %p87
        %p240 = scmp.lt.s32.totalorder %s22, 1
        %s241 = scalar_select %p240, %s22, 1
        %s242 = scalar_lea.vmem %s3, %s241
        %p243 = pneg %p116
        %p244 = pneg %p113
        %p245 = pneg %p142
        %p246 = pneg %p139
        %s247 = sand.u32 %s129, 1
        %s248 = scalar_lea.sflag [#allocation4], %s247
        %s249 = sand.u32 %s129, 1
        %s250 = smul.addr %s249, 64
        %s251 = scalar_lea.vmem [#allocation7], %s250
        %p252 = scmp.lt.s32.totalorder %s22, 1
        %s253 = scalar_select %p252, %s22, 1
        %s254 = scalar_lea.vmem %s2, %s253
        %p255 = scmp.lt.s32.totalorder %s22, 1
        %s256 = scalar_select %p255, %s22, 1
        %s257 = scalar_lea.vmem %s3, %s256
        %v259 = vld [vmem:[#allocation2] sm:$0xf]
        %v260 = vld [vmem:[#allocation2 + $0x4] sm:$0xf]
        %v261 = vld [vmem:[#allocation2 + $0x8] sm:$0xf]
        %v262 = vld [vmem:[#allocation2 + $0xc] sm:$0xf]
        %v263 = vld [vmem:[#allocation2 + $0x10] sm:$0xf]
        %v264 = vld [vmem:[#allocation2 + $0x14] sm:$0xf]
        %v265 = vld [vmem:[#allocation2 + $0x18] sm:$0xf]
        %v266 = vld [vmem:[#allocation2 + $0x1c] sm:$0xf]
        %v267 = vld [vmem:[#allocation2 + $0x20] sm:$0xf]
        %v268 = vld [vmem:[#allocation2 + $0x24] sm:$0xf]
        %v269 = vld [vmem:[#allocation2 + $0x28] sm:$0xf]
        %v270 = vld [vmem:[#allocation2 + $0x2c] sm:$0xf]
        %v271 = vld [vmem:[#allocation2 + $0x30] sm:$0xf]
        %v272 = vld [vmem:[#allocation2 + $0x34] sm:$0xf]
        %v273 = vld [vmem:[#allocation2 + $0x38] sm:$0xf]
        %v274 = vld [vmem:[#allocation2 + $0x3c] sm:$0xf]
        %v275 = vld [vmem:[%s221] sm:$0xf]
        %v276 = vld [vmem:[%s221 + $0x4] sm:$0xf]
        %v277 = vld [vmem:[%s221 + $0x8] sm:$0xf]
        %v278 = vld [vmem:[%s221 + $0xc] sm:$0xf]
        %v279 = vld [vmem:[%s221 + $0x10] sm:$0xf]
        %v280 = vld [vmem:[%s221 + $0x14] sm:$0xf]
        %v281 = vld [vmem:[%s221 + $0x18] sm:$0xf]
        %v282 = vld [vmem:[%s221 + $0x1c] sm:$0xf]
        %v283 = vld [vmem:[%s221 + $0x20] sm:$0xf]
        %v284 = vld [vmem:[%s221 + $0x24] sm:$0xf]
        %v285 = vld [vmem:[%s221 + $0x28] sm:$0xf]
        %v286 = vld [vmem:[%s221 + $0x2c] sm:$0xf]
        %v287 = vld [vmem:[%s221 + $0x30] sm:$0xf]
        %v288 = vld [vmem:[%s221 + $0x34] sm:$0xf]
        %v289 = vld [vmem:[%s221 + $0x38] sm:$0xf]
        %v290 = vld [vmem:[%s221 + $0x3c] sm:$0xf]
        %v307 = vunpack.c.l.b16 %v259
        %v308 = vunpack.c.l.b16 %v260
        %v309 = vunpack.c.l.b16 %v261
        %v310 = vunpack.c.l.b16 %v262
        %v311 = vunpack.c.l.b16 %v263
        %v312 = vunpack.c.l.b16 %v264
        %v313 = vunpack.c.l.b16 %v265
        %v314 = vunpack.c.l.b16 %v266
        %v315 = vunpack.c.l.b16 %v267
        %v316 = vunpack.c.l.b16 %v268
        %v317 = vunpack.c.l.b16 %v269
        %v318 = vunpack.c.l.b16 %v270
        %v319 = vunpack.c.l.b16 %v271
        %v320 = vunpack.c.l.b16 %v272
        %v321 = vunpack.c.l.b16 %v273
        %v322 = vunpack.c.l.b16 %v274
        %v323 = vpack.c.b16 %v308, %v307
        %v324 = vpack.c.b16 %v310, %v309
        %v325 = vpack.c.b16 %v312, %v311
        %v326 = vpack.c.b16 %v314, %v313
        %v327 = vpack.c.b16 %v316, %v315
        %v328 = vpack.c.b16 %v318, %v317
        %v329 = vpack.c.b16 %v320, %v319
        %v330 = vpack.c.b16 %v322, %v321
        %v355 = vunpack.c.l.b16 %v275
        %v356 = vunpack.c.l.b16 %v276
        %v357 = vunpack.c.l.b16 %v277
        %v358 = vunpack.c.l.b16 %v278
        %v359 = vunpack.c.l.b16 %v279
        %v360 = vunpack.c.l.b16 %v280
        %v361 = vunpack.c.l.b16 %v281
        %v362 = vunpack.c.l.b16 %v282
        %v363 = vunpack.c.l.b16 %v283
        %v364 = vunpack.c.l.b16 %v284
        %v365 = vunpack.c.l.b16 %v285
        %v366 = vunpack.c.l.b16 %v286
        %v367 = vunpack.c.l.b16 %v287
        %v368 = vunpack.c.l.b16 %v288
        %v369 = vunpack.c.l.b16 %v289
        %v370 = vunpack.c.l.b16 %v290
        %v371 = vpack.c.b16 %v356, %v355
        %v372 = vpack.c.b16 %v358, %v357
        %v373 = vpack.c.b16 %v360, %v359
        %v374 = vpack.c.b16 %v362, %v361
        %v375 = vpack.c.b16 %v364, %v363
        %v376 = vpack.c.b16 %v366, %v365
        %v377 = vpack.c.b16 %v368, %v367
        %v378 = vpack.c.b16 %v370, %v369
        %387 = vmatprep.subr.bf16.mxu0 0
        %388 = vmatpush1.bf16.msra.mxu0 %v371
        %389 = vmatprep.subr.bf16.mxu0 0
        %390 = vmatpush1.bf16.msra.mxu0 %v372
        %391 = vmatprep.subr.bf16.mxu0 0
        %392 = vmatpush1.bf16.msra.mxu0 %v373
        %393 = vmatprep.subr.bf16.mxu0 0
        %394 = vmatpush1.bf16.msra.mxu0 %v374
        %395 = vmatprep.subr.bf16.mxu0 0
        %396 = vmatpush1.bf16.msra.mxu0 %v375
        %397 = vmatprep.subr.bf16.mxu0 0
        %398 = vmatpush1.bf16.msra.mxu0 %v376
        %399 = vmatprep.subr.bf16.mxu0 0
        %400 = vmatpush1.bf16.msra.mxu0 %v377
        %401 = vmatprep.subr.bf16.mxu0 0
        %402 = vmatpush1.bf16.msra.mxu0 %v378
        %403 = vmatprep.subr.bf16.mxu0 0
        %404 = vmatpush1.bf16.msra.mxu0 0
        %405 = vmatprep.subr.bf16.mxu0 0
        %406 = vmatpush1.bf16.msra.mxu0 0
        %407 = vmatprep.subr.bf16.mxu0 0
        %408 = vmatpush1.bf16.msra.mxu0 0
        %409 = vmatprep.subr.bf16.mxu0 0
        %410 = vmatpush1.bf16.msra.mxu0 0
        %411 = vmatprep.subr.bf16.mxu0 0
        %412 = vmatpush1.bf16.msra.mxu0 0
        %413 = vmatprep.subr.bf16.mxu0 0
        %414 = vmatpush1.bf16.msra.mxu0 0
        %415 = vmatprep.subr.bf16.mxu0 0
        %416 = vmatpush1.bf16.msra.mxu0 0
        %417 = vmatprep.subr.bf16.mxu0 0
        %418 = vmatpush1.bf16.msra.mxu0 0
        %419 = vmatprep.mubr.bf16.mxu0 0
        %420 = vmatmul.mubr.bf16.gmra.mrb[0].mxu0 %v323
        %v421 = vpop.f32.mrb[0].mxu0
        %v422 = vadd.f32 0.0, %v421
        %v423 = vpop.f32.mrb[0].mxu0
        %v424 = vpop.f32.mrb[0].mxu0
        %v425 = vadd.f32 0.0, %v424
        %v426 = vpop.f32.mrb[0].mxu0
        %427 = vmatprep.mubr.bf16.mxu0 0
        %428 = vmatmul.mubr.bf16.gmra.mrb[0].mxu0 %v324
        %v429 = vpop.f32.mrb[0].mxu0
        %v430 = vadd.f32 0.0, %v429
        %v431 = vpop.f32.mrb[0].mxu0
        %v432 = vpop.f32.mrb[0].mxu0
        %v433 = vadd.f32 0.0, %v432
        %v434 = vpop.f32.mrb[0].mxu0
        %435 = vmatprep.mubr.bf16.mxu0 0
        %436 = vmatmul.mubr.bf16.gmra.mrb[0].mxu0 %v325
        %v437 = vpop.f32.mrb[0].mxu0
        %v438 = vadd.f32 0.0, %v437
        %v439 = vpop.f32.mrb[0].mxu0
        %v440 = vpop.f32.mrb[0].mxu0
        %v441 = vadd.f32 0.0, %v440
        %v442 = vpop.f32.mrb[0].mxu0
        %443 = vmatprep.mubr.bf16.mxu0 0
        %444 = vmatmul.mubr.bf16.gmra.mrb[0].mxu0 %v326
        %v445 = vpop.f32.mrb[0].mxu0
        %v446 = vadd.f32 0.0, %v445
        %v447 = vpop.f32.mrb[0].mxu0
        %v448 = vpop.f32.mrb[0].mxu0
        %v449 = vadd.f32 0.0, %v448
        %v450 = vpop.f32.mrb[0].mxu0
        %451 = vmatprep.mubr.bf16.mxu0 0
        %452 = vmatmul.mubr.bf16.gmra.mrb[0].mxu0 %v327
        %v453 = vpop.f32.mrb[0].mxu0
        %v454 = vadd.f32 0.0, %v453
        %v455 = vpop.f32.mrb[0].mxu0
        %v456 = vpop.f32.mrb[0].mxu0
        %v457 = vadd.f32 0.0, %v456
        %v458 = vpop.f32.mrb[0].mxu0
        %459 = vmatprep.mubr.bf16.mxu0 0
        %460 = vmatmul.mubr.bf16.gmra.mrb[0].mxu0 %v328
        %v461 = vpop.f32.mrb[0].mxu0
        %v462 = vadd.f32 0.0, %v461
        %v463 = vpop.f32.mrb[0].mxu0
        %v464 = vpop.f32.mrb[0].mxu0
        %v465 = vadd.f32 0.0, %v464
        %v466 = vpop.f32.mrb[0].mxu0
        %467 = vmatprep.mubr.bf16.mxu0 0
        %468 = vmatmul.mubr.bf16.gmra.mrb[0].mxu0 %v329
        %v469 = vpop.f32.mrb[0].mxu0
        %v470 = vadd.f32 0.0, %v469
        %v471 = vpop.f32.mrb[0].mxu0
        %v472 = vpop.f32.mrb[0].mxu0
        %v473 = vadd.f32 0.0, %v472
        %v474 = vpop.f32.mrb[0].mxu0
        %475 = vmatprep.mubr.bf16.mxu0 0
        %476 = vmatmul.mubr.bf16.gmra.mrb[0].mxu0 %v330
        %v477 = vpop.f32.mrb[0].mxu0
        %v478 = vadd.f32 0.0, %v477
        %v479 = vpop.f32.mrb[0].mxu0
        %v480 = vpop.f32.mrb[0].mxu0
        %v481 = vadd.f32 0.0, %v480
        %v482 = vpop.f32.mrb[0].mxu0
        %483 = vdwg.mxu0
        %v484 = vadd.f32 %v422, %v425
        %v485 = vadd.f32 %v484, %v430
        %v486 = vadd.f32 %v485, %v433
        %v487 = vadd.f32 %v486, %v438
        %v488 = vadd.f32 %v487, %v441
        %v489 = vadd.f32 %v488, %v446
        %v490 = vadd.f32 %v489, %v449
        %v491 = vadd.f32 %v490, %v454
        %v492 = vadd.f32 %v491, %v457
        %v493 = vadd.f32 %v492, %v462
        %v494 = vadd.f32 %v493, %v465
        %v495 = vadd.f32 %v494, %v470
        %v496 = vadd.f32 %v495, %v473
        %v497 = vadd.f32 %v496, %v478
        %v498 = vadd.f32 %v497, %v481
        %v499 = vrot.slane %v498, 4
        %v500 = vadd.f32 %v498, %v499
        %v501 = vrot.slane %v500, 2
        %v502 = vadd.f32 %v500, %v501
        %v503 = vrot.slane %v502, 1
        %v504 = vadd.f32 %v502, %v503
        %v505 = vmul.f32 %v504, 0.0078125
        %v506 = vmul.f32 %v422, %v422
        %v507 = vmul.f32 %v425, %v425
        %v508 = vmul.f32 %v430, %v430
        %v509 = vmul.f32 %v433, %v433
        %v510 = vmul.f32 %v438, %v438
        %v511 = vmul.f32 %v441, %v441
        %v512 = vmul.f32 %v446, %v446
        %v513 = vmul.f32 %v449, %v449
        %v514 = vmul.f32 %v454, %v454
        %v515 = vmul.f32 %v457, %v457
        %v516 = vmul.f32 %v462, %v462
        %v517 = vmul.f32 %v465, %v465
        %v518 = vmul.f32 %v470, %v470
        %v519 = vmul.f32 %v473, %v473
        %v520 = vmul.f32 %v478, %v478
        %v521 = vmul.f32 %v481, %v481
        %v522 = vadd.f32 %v506, %v507
        %v523 = vadd.f32 %v522, %v508
        %v524 = vadd.f32 %v523, %v509
        %v525 = vadd.f32 %v524, %v510
        %v526 = vadd.f32 %v525, %v511
        %v527 = vadd.f32 %v526, %v512
        %v528 = vadd.f32 %v527, %v513
        %v529 = vadd.f32 %v528, %v514
        %v530 = vadd.f32 %v529, %v515
        %v531 = vadd.f32 %v530, %v516
        %v532 = vadd.f32 %v531, %v517
        %v533 = vadd.f32 %v532, %v518
        %v534 = vadd.f32 %v533, %v519
        %v535 = vadd.f32 %v534, %v520
        %v536 = vadd.f32 %v535, %v521
        %v537 = vrot.slane %v536, 4
        %v538 = vadd.f32 %v536, %v537
        %v539 = vrot.slane %v538, 2
        %v540 = vadd.f32 %v538, %v539
        %v541 = vrot.slane %v540, 1
        %v542 = vadd.f32 %v540, %v541
        %v543 = vmul.f32 %v542, 0.0078125
        %v544 = vmul.f32 %v505, %v505
        %v545 = vsub.f32 %v543, %v544
        %v546 = vmax.f32 %v545, 0.0
        %v547 = vld [vmem:[%s254] sm:$0x1]
        %v548 = vadd.f32 %v546, 1e-05
        %v549 = vrsqrt.pop %v548
        %v550 = vmul.f32 %v547, %v549
        %v551 = vld [vmem:[%s257] sm:$0x1]
        %v552 = vmul.f32 %v505, %v550
        %v553 = vsub.f32 %v551, %v552
        %v555 = vlaneseq
        %v556 = vshrl.u32 %v555, 7
        %v557 = vsub.s32 0, %v556
        %v558 = vrot.slane %v550, %v557
        %v560 = vmul.f32 %v422, %v558
        %v561 = vmul.f32 %v425, %v558
        %v562 = vmul.f32 %v430, %v558
        %v563 = vmul.f32 %v433, %v558
        %v564 = vmul.f32 %v438, %v558
        %v565 = vmul.f32 %v441, %v558
        %v566 = vmul.f32 %v446, %v558
        %v567 = vmul.f32 %v449, %v558
        %v568 = vmul.f32 %v454, %v558
        %v569 = vmul.f32 %v457, %v558
        %v570 = vmul.f32 %v462, %v558
        %v571 = vmul.f32 %v465, %v558
        %v572 = vmul.f32 %v470, %v558
        %v573 = vmul.f32 %v473, %v558
        %v574 = vmul.f32 %v478, %v558
        %v575 = vmul.f32 %v481, %v558
        %v577 = vlaneseq
        %v578 = vshrl.u32 %v577, 7
        %v579 = vsub.s32 0, %v578
        %v580 = vrot.slane %v553, %v579
        %v582 = vadd.f32 %v560, %v580
        %v583 = vadd.f32 %v561, %v580
        %v584 = vadd.f32 %v562, %v580
        %v585 = vadd.f32 %v563, %v580
        %v586 = vadd.f32 %v564, %v580
        %v587 = vadd.f32 %v565, %v580
        %v588 = vadd.f32 %v566, %v580
        %v589 = vadd.f32 %v567, %v580
        %v590 = vadd.f32 %v568, %v580
        %v591 = vadd.f32 %v569, %v580
        %v592 = vadd.f32 %v570, %v580
        %v593 = vadd.f32 %v571, %v580
        %v594 = vadd.f32 %v572, %v580
        %v595 = vadd.f32 %v573, %v580
        %v596 = vadd.f32 %v574, %v580
        %v597 = vadd.f32 %v575, %v580
        %v598 = vmax.f32 %v582, 0.0
        %v599 = vmax.f32 %v583, 0.0
        %v600 = vmax.f32 %v584, 0.0
        %v601 = vmax.f32 %v585, 0.0
        %v602 = vmax.f32 %v586, 0.0
        %v603 = vmax.f32 %v587, 0.0
        %v604 = vmax.f32 %v588, 0.0
        %v605 = vmax.f32 %v589, 0.0
        %v606 = vmax.f32 %v590, 0.0
        %v607 = vmax.f32 %v591, 0.0
        %v608 = vmax.f32 %v592, 0.0
        %v609 = vmax.f32 %v593, 0.0
        %v610 = vmax.f32 %v594, 0.0
        %v611 = vmax.f32 %v595, 0.0
        %v612 = vmax.f32 %v596, 0.0
        %v613 = vmax.f32 %v597, 0.0
        %v614 = vpack.c.bf16 %v599, %v598
        %v615 = vpack.c.bf16 %v601, %v600
        %v616 = vpack.c.bf16 %v603, %v602
        %v617 = vpack.c.bf16 %v605, %v604
        %v618 = vpack.c.bf16 %v607, %v606
        %v619 = vpack.c.bf16 %v609, %v608
        %v620 = vpack.c.bf16 %v611, %v610
        %v621 = vpack.c.bf16 %v613, %v612
        %v630 = vunpack.c.l.b16 %v614
        %v631 = vunpack.c.h.b16 %v614
        %v632 = vunpack.c.l.b16 %v615
        %v633 = vunpack.c.h.b16 %v615
        %v634 = vunpack.c.l.b16 %v616
        %v635 = vunpack.c.h.b16 %v616
        %v636 = vunpack.c.l.b16 %v617
        %v637 = vunpack.c.h.b16 %v617
        %v638 = vunpack.c.l.b16 %v618
        %v639 = vunpack.c.h.b16 %v618
        %v640 = vunpack.c.l.b16 %v619
        %v641 = vunpack.c.h.b16 %v619
        %v642 = vunpack.c.l.b16 %v620
        %v643 = vunpack.c.h.b16 %v620
        %v644 = vunpack.c.l.b16 %v621
        %v645 = vunpack.c.h.b16 %v621
        %v646 = vpack.c.b16 %v630, %v630
        %v647 = vpack.c.b16 %v631, %v631
        %v648 = vpack.c.b16 %v632, %v632
        %v649 = vpack.c.b16 %v633, %v633
        %v650 = vpack.c.b16 %v634, %v634
        %v651 = vpack.c.b16 %v635, %v635
        %v652 = vpack.c.b16 %v636, %v636
        %v653 = vpack.c.b16 %v637, %v637
        %v654 = vpack.c.b16 %v638, %v638
        %v655 = vpack.c.b16 %v639, %v639
        %v656 = vpack.c.b16 %v640, %v640
        %v657 = vpack.c.b16 %v641, %v641
        %v658 = vpack.c.b16 %v642, %v642
        %v659 = vpack.c.b16 %v643, %v643
        %v660 = vpack.c.b16 %v644, %v644
        %v661 = vpack.c.b16 %v645, %v645
        %678 = vst [vmem:[%s251] sm:$0xf] %v646
        %679 = vst [vmem:[%s251 + $0x4] sm:$0xf] %v647
        %680 = vst [vmem:[%s251 + $0x8] sm:$0xf] %v648
        %681 = vst [vmem:[%s251 + $0xc] sm:$0xf] %v649
        %682 = vst [vmem:[%s251 + $0x10] sm:$0xf] %v650
        %683 = vst [vmem:[%s251 + $0x14] sm:$0xf] %v651
        %684 = vst [vmem:[%s251 + $0x18] sm:$0xf] %v652
        %685 = vst [vmem:[%s251 + $0x1c] sm:$0xf] %v653
        %686 = vst [vmem:[%s251 + $0x20] sm:$0xf] %v654
        %687 = vst [vmem:[%s251 + $0x24] sm:$0xf] %v655
        %688 = vst [vmem:[%s251 + $0x28] sm:$0xf] %v656
        %689 = vst [vmem:[%s251 + $0x2c] sm:$0xf] %v657
        %690 = vst [vmem:[%s251 + $0x30] sm:$0xf] %v658
        %691 = vst [vmem:[%s251 + $0x34] sm:$0xf] %v659
        %692 = vst [vmem:[%s251 + $0x38] sm:$0xf] %v660
        %693 = vst [vmem:[%s251 + $0x3c] sm:$0xf] %v661
        %s694 = sand.u32 %s129, 1
        %s695 = scalar_lea.sflag [#allocation4], %s694
        %s696 = sand.u32 %s129, 1
        %s697 = smul.addr %s696, 64
        %s698 = scalar_lea.vmem [#allocation7], %s697
        // Predicated region
        $region45: #{tpu_custom_call.1} parent=35 // pred_check
          %p699 = pneg %p139
        $region46: #{tpu_custom_call.1} parent=35 // pred_check_branch
          %701 = sbr.rel (%p699) target = $region48
        $region47: #{tpu_custom_call.1} parent=35 // pred_region
          %s703 = ssub.s32 1024, 1024
          %704 = vsyncadd %s695, %s703
          %s705 = smul.addr %s22, 64
          %s706 = scalar_lea.hbm %s4, %s705
          %s707 = sshll.u32 %s698, 4
          %s708 = int_to_ptr.vmem [resolvable:$true] %s707
          %713 = dma.vmem_to_hbm [thread:$0]  %s708, 1024, %s706, %s695, 64, 128, 4
        $region48: #{tpu_custom_call.1} parent=35 // pred_fallthru
          _
      $region36: #{tpu_custom_call.1} parent=5 // pred_fallthru
        _
      %p714 = scmp.le.s32.totalorder 2, %s17
      // Predicated region
      $region49: #{tpu_custom_call.1} parent=5 // pred_check
        %p715 = pneg %p714
      $region50: #{tpu_custom_call.1} parent=5 // pred_check_branch
        %717 = sbr.rel (%p715) target = $region52
      $region51: #{tpu_custom_call.1} parent=5 // pred_region
        %s718 = ssub.s32 %s17, 2
        // Predicated region
        $region53: #{tpu_custom_call.1} parent=51 // pred_check
          %p719 = pneg %p145
        $region54: #{tpu_custom_call.1} parent=51 // pred_check_branch
          %721 = sbr.rel (%p719) target = $region56
        $region55: #{tpu_custom_call.1} parent=51 // pred_region
          %s722 = sand.u32 %s130, 1
          %s723 = scalar_lea.sflag [#allocation4], %s722
          %s724 = sand.u32 %s130, 1
          %s725 = smul.addr %s724, 64
          %s726 = scalar_lea.vmem [#allocation7], %s725
          %727 = dma.done %s723, 1024
        $region56: #{tpu_custom_call.1} parent=51 // pred_fallthru
          _
      $region52: #{tpu_custom_call.1} parent=5 // pred_fallthru
        _
    $region6: #{tpu_custom_call.1} parent=1 // loop_footer
      %s21 = sadd.s32 1, %s17
    $region7: #{tpu_custom_call.1} parent=1 // loop_footer_branch
      %16 = sbr.rel target = $region3
    $region8: #{tpu_custom_call.1} parent=1 // loop_exit
      _
    %728 = vsyncpa [#allocation3], 1
    %s729 = scalar_lea.sflag [#allocation3], 1
    %730 = vsyncpa %s729, 1
    %731 = vsyncpa [#allocation6], 1
    %s732 = scalar_lea.sflag [#allocation6], 1
    %733 = vsyncpa %s732, 1
    %734 = vsyncpa [#allocation4], 1
    %s735 = scalar_lea.sflag [#allocation4], 1
    %736 = vsyncpa %s735, 1

</llo_original>
